<compile_context>
chip_gen: v6e
topology: v6e:2x2x1
jax: 0.10.0
libtpu: 0.0.40
codegen_flags: <defaults>
</compile_context>

<pallas_src>
import functools

import jax
import jax.numpy as jnp
from jax.experimental import pallas as pl
from jax.experimental.pallas import tpu as pltpu


def _value_net_kernel(x_ref, w1_ref, b1_ref, w2_ref, b2_ref, w3_ref, b3_ref, o_ref):
    # linear1 + relu  (MXU)
    h1 = jnp.dot(x_ref[...], w1_ref[...], preferred_element_type=jnp.float32)
    h1 = jnp.maximum(h1 + b1_ref[...], 0.0)
    # linear2 + relu  (MXU)
    h2 = jnp.dot(h1, w2_ref[...], preferred_element_type=jnp.float32)
    h2 = jnp.maximum(h2 + b2_ref[...], 0.0)
    # linear3 (out_features == 1): VPU multiply + lane reduction instead of a
    # 1-wide MXU matmul.  w3_ref is (1, H); result is (TB,).
    out = jnp.sum(h2 * w3_ref[...], axis=-1)
    # Lane-dense store: (1, TB) slab.  b3_ref is (1, 1), broadcasts over lanes.
    o_ref[...] = (out[None, :] + b3_ref[...]).astype(o_ref.dtype)


def _round_up(x, m):
    return pl.cdiv(x, m) * m


@functools.partial(jax.jit, static_argnames=("block_b",))
def value_network_forward(state, params, *, block_b=512):
    """state: (B, num_inputs) float32; params: dict of w1,b1,w2,b2,w3,b3."""
    B, num_inputs = state.shape
    hidden = params["w1"].shape[1]

    # Batch tile: multiple of 8 sublanes; either full (small B) or 512 rows.
    TB = min(block_b, _round_up(B, 8))
    Bp = _round_up(B, TB)
    if Bp != B:
        state = jnp.pad(state, ((0, Bp - B), (0, 0)))
    num_tiles = Bp // TB

    w1, b1 = params["w1"], params["b1"]
    w2, b2 = params["w2"], params["b2"]
    w3_row = params["w3"].reshape(1, hidden)   # (H, 1) -> (1, H), same flat order
    b3 = params["b3"]

    grid_spec = pltpu.PrefetchScalarGridSpec(
        num_scalar_prefetch=0,
        grid=(num_tiles,),
        in_specs=[
            pl.BlockSpec((TB, num_inputs), lambda i: (i, 0)),        # state tile
            pl.BlockSpec((num_inputs, hidden), lambda i: (0, 0)),    # w1 (resident)
            pl.BlockSpec((1, hidden), lambda i: (0, 0)),             # b1
            pl.BlockSpec((hidden, hidden), lambda i: (0, 0)),        # w2
            pl.BlockSpec((1, hidden), lambda i: (0, 0)),             # b2
            pl.BlockSpec((1, hidden), lambda i: (0, 0)),             # w3 (row)
            pl.BlockSpec((1, 1), lambda i: (0, 0)),                  # b3
        ],
        # Lane-dense output: (1, Bp) array, one (1, TB) slab per grid step.
        out_specs=pl.BlockSpec((1, TB), lambda i: (0, i)),
    )

    weight_bytes = 4 * (w1.size + b1.size + w2.size + b2.size + w3_row.size + b3.size)
    cost = pl.CostEstimate(
        flops=2 * Bp * (num_inputs * hidden + hidden * hidden + hidden),
        transcendentals=0,
        bytes_accessed=Bp * num_inputs * 4 + Bp * 4 + weight_bytes,
    )

    out_row = pl.pallas_call(
        _value_net_kernel,
        out_shape=jax.ShapeDtypeStruct((1, Bp), jnp.float32),
        grid_spec=grid_spec,
        compiler_params=pltpu.CompilerParams(
            dimension_semantics=("parallel",),      # split batch tiles across TCs (v7x)
            vmem_limit_bytes=32 * 1024 * 1024,      # explicit, safe on v5e/v6e/v7x
        ),
        cost_estimate=cost,
    )(state, w1, b1, w2, b2, w3_row, b3)

    # (1, Bp) -> (B, 1)
    return out_row.reshape(Bp, 1)[:B]


def xavier_uniform(key, fan_in, fan_out, gain=1.0):
    # matches torch.nn.init.xavier_uniform_ (gain=1)
    limit = gain * jnp.sqrt(6.0 / (fan_in + fan_out))
    return jax.random.uniform(key, (fan_in, fan_out), jnp.float32, -limit, limit)


def init_value_network(key, num_inputs, hidden_dim):
    k1, k2, k3 = jax.random.split(key, 3)
    return {
        "w1": xavier_uniform(k1, num_inputs, hidden_dim),
        "b1": jnp.zeros((1, hidden_dim), jnp.float32),
        "w2": xavier_uniform(k2, hidden_dim, hidden_dim),
        "b2": jnp.zeros((1, hidden_dim), jnp.float32),
        "w3": xavier_uniform(k3, hidden_dim, 1),
        "b3": jnp.zeros((1, 1), jnp.float32),
    }


def value_network_ref(state, params):
    h = jnp.maximum(state @ params["w1"] + params["b1"], 0.0)
    h = jnp.maximum(h @ params["w2"] + params["b2"], 0.0)
    return h @ params["w3"] + params["b3"]


if __name__ == "__main__":
    key = jax.random.PRNGKey(0)
    k_param, k_state1, k_state2 = jax.random.split(key, 3)

    num_inputs, hidden_dim = 16, 32
    params = init_value_network(k_param, num_inputs, hidden_dim)

    # Small batch (single tile, TB == padded B).
    state_small = jax.random.normal(k_state1, (8, num_inputs), jnp.float32)
    out_small = jax.block_until_ready(value_network_forward(state_small, params))
    ref_small = value_network_ref(state_small, params)
    assert out_small.shape == (8, 1), out_small.shape
    assert jnp.allclose(out_small, ref_small, atol=1e-5, rtol=1e-5)

    # Larger, non-divisible batch (exercises grid + padding path).
    state_big = jax.random.normal(k_state2, (1000, num_inputs), jnp.float32)
    out_big = jax.block_until_ready(value_network_forward(state_big, params))
    ref_big = value_network_ref(state_big, params)
    assert out_big.shape == (1000, 1), out_big.shape
    assert jnp.allclose(out_big, ref_big, atol=1e-5, rtol=1e-5)

    print("KERNEL_OK")
</pallas_src>

<mosaic_0001>
module attributes {stable_mosaic.version = 11 : i64} {
  func.func @_value_net_kernel(%arg0: i32, %arg1: memref<8x16xf32, #tpu.memory_space<vmem>>, %arg2: memref<16x32xf32, #tpu.memory_space<vmem>>, %arg3: memref<1x32xf32, #tpu.memory_space<vmem>>, %arg4: memref<32x32xf32, #tpu.memory_space<vmem>>, %arg5: memref<1x32xf32, #tpu.memory_space<vmem>>, %arg6: memref<1x32xf32, #tpu.memory_space<vmem>>, %arg7: memref<1x1xf32, #tpu.memory_space<vmem>>, %arg8: memref<1x8xf32, #tpu.memory_space<vmem>>) attributes {dimension_semantics = [#tpu.dimension_semantics<parallel>], iteration_bounds = array<i64: 1>, scalar_prefetch = 0 : i64, scratch_operands = 0 : i64, tpu.core_type = #tpu.core_type<tc>, window_params = [{transform_indices = @transform_0, window_bounds = array<i64: 8, 16>}, {pipeline_mode = #tpu.pipeline_mode<synchronous>, transform_indices = @transform_1, window_bounds = array<i64: 16, 32>}, {pipeline_mode = #tpu.pipeline_mode<synchronous>, transform_indices = @transform_2, window_bounds = array<i64: 1, 32>}, {pipeline_mode = #tpu.pipeline_mode<synchronous>, transform_indices = @transform_3, window_bounds = array<i64: 32, 32>}, {pipeline_mode = #tpu.pipeline_mode<synchronous>, transform_indices = @transform_4, window_bounds = array<i64: 1, 32>}, {pipeline_mode = #tpu.pipeline_mode<synchronous>, transform_indices = @transform_5, window_bounds = array<i64: 1, 32>}, {pipeline_mode = #tpu.pipeline_mode<synchronous>, transform_indices = @transform_6, window_bounds = array<i64: 1, 1>}, {transform_indices = @transform_7, window_bounds = array<i64: 1, 8>}]} {
    %c0 = arith.constant 0 : index
    %c0_0 = arith.constant 0 : index
    %0 = vector.load %arg1[%c0, %c0_0] : memref<8x16xf32, #tpu.memory_space<vmem>>, vector<8x16xf32>
    %c0_1 = arith.constant 0 : index
    %c0_2 = arith.constant 0 : index
    %1 = vector.load %arg2[%c0_1, %c0_2] : memref<16x32xf32, #tpu.memory_space<vmem>>, vector<16x32xf32>
    %cst = arith.constant dense<0.000000e+00> : vector<8x32xf32>
    %2 = tpu.matmul %0, %1, %cst {dimension_numbers = #tpu.dot_dimension_numbers<[1], [0], [0], [1], [0, 0, 1, 1], [], []>} : vector<8x16xf32>, vector<16x32xf32>, vector<8x32xf32> -> vector<8x32xf32>
    %c0_3 = arith.constant 0 : index
    %c0_4 = arith.constant 0 : index
    %3 = vector.load %arg3[%c0_3, %c0_4] : memref<1x32xf32, #tpu.memory_space<vmem>>, vector<1x32xf32>
    %4 = vector.broadcast %3 : vector<1x32xf32> to vector<8x32xf32>
    %5 = arith.addf %2, %4 : vector<8x32xf32>
    %cst_5 = arith.constant 0.000000e+00 : f32
    %6 = vector.broadcast %cst_5 : f32 to vector<8x32xf32>
    %7 = arith.maximumf %5, %6 : vector<8x32xf32>
    %c0_6 = arith.constant 0 : index
    %c0_7 = arith.constant 0 : index
    %8 = vector.load %arg4[%c0_6, %c0_7] : memref<32x32xf32, #tpu.memory_space<vmem>>, vector<32x32xf32>
    %cst_8 = arith.constant dense<0.000000e+00> : vector<8x32xf32>
    %9 = tpu.matmul %7, %8, %cst_8 {dimension_numbers = #tpu.dot_dimension_numbers<[1], [0], [0], [1], [0, 0, 1, 1], [], []>} : vector<8x32xf32>, vector<32x32xf32>, vector<8x32xf32> -> vector<8x32xf32>
    %c0_9 = arith.constant 0 : index
    %c0_10 = arith.constant 0 : index
    %10 = vector.load %arg5[%c0_9, %c0_10] : memref<1x32xf32, #tpu.memory_space<vmem>>, vector<1x32xf32>
    %11 = vector.broadcast %10 : vector<1x32xf32> to vector<8x32xf32>
    %12 = arith.addf %9, %11 : vector<8x32xf32>
    %cst_11 = arith.constant 0.000000e+00 : f32
    %13 = vector.broadcast %cst_11 : f32 to vector<8x32xf32>
    %14 = arith.maximumf %12, %13 : vector<8x32xf32>
    %c0_12 = arith.constant 0 : index
    %c0_13 = arith.constant 0 : index
    %15 = vector.load %arg6[%c0_12, %c0_13] : memref<1x32xf32, #tpu.memory_space<vmem>>, vector<1x32xf32>
    %16 = vector.broadcast %15 : vector<1x32xf32> to vector<8x32xf32>
    %17 = arith.mulf %14, %16 : vector<8x32xf32>
    %cst_14 = arith.constant dense<0.000000e+00> : vector<8xf32>
    %18 = vector.multi_reduction <add>, %17, %cst_14 [1] : vector<8x32xf32> to vector<8xf32>
    %19 = vector.shape_cast %18 : vector<8xf32> to vector<1x8xf32>
    %c0_15 = arith.constant 0 : index
    %c0_16 = arith.constant 0 : index
    %20 = vector.load %arg7[%c0_15, %c0_16] : memref<1x1xf32, #tpu.memory_space<vmem>>, vector<1x1xf32>
    %21 = vector.broadcast %20 : vector<1x1xf32> to vector<1x8xf32>
    %22 = arith.addf %19, %21 : vector<1x8xf32>
    %c0_17 = arith.constant 0 : index
    %c0_18 = arith.constant 0 : index
    %23 = vector.load %arg8[%c0_17, %c0_18] : memref<1x8xf32, #tpu.memory_space<vmem>>, vector<1x8xf32>
    tpu.vector_store %arg8[%c0_17, %c0_18], %22 {strides = array<i32>} : memref<1x8xf32, #tpu.memory_space<vmem>>, vector<1x8xf32>,
    return
  }
  func.func @transform_0(%arg0: i32) -> (i32, i32) {
    %c0_i32 = arith.constant 0 : i32
    %c0_i32_0 = arith.constant 0 : i32
    return %arg0, %c0_i32 : i32, i32
  }
  func.func @transform_1(%arg0: i32) -> (i32, i32) {
    %c0_i32 = arith.constant 0 : i32
    %c0_i32_0 = arith.constant 0 : i32
    %c0_i32_1 = arith.constant 0 : i32
    return %c0_i32, %c0_i32_0 : i32, i32
  }
  func.func @transform_2(%arg0: i32) -> (i32, i32) {
    %c0_i32 = arith.constant 0 : i32
    %c0_i32_0 = arith.constant 0 : i32
    %c0_i32_1 = arith.constant 0 : i32
    return %c0_i32, %c0_i32_0 : i32, i32
  }
  func.func @transform_3(%arg0: i32) -> (i32, i32) {
    %c0_i32 = arith.constant 0 : i32
    %c0_i32_0 = arith.constant 0 : i32
    %c0_i32_1 = arith.constant 0 : i32
    return %c0_i32, %c0_i32_0 : i32, i32
  }
  func.func @transform_4(%arg0: i32) -> (i32, i32) {
    %c0_i32 = arith.constant 0 : i32
    %c0_i32_0 = arith.constant 0 : i32
    %c0_i32_1 = arith.constant 0 : i32
    return %c0_i32, %c0_i32_0 : i32, i32
  }
  func.func @transform_5(%arg0: i32) -> (i32, i32) {
    %c0_i32 = arith.constant 0 : i32
    %c0_i32_0 = arith.constant 0 : i32
    %c0_i32_1 = arith.constant 0 : i32
    return %c0_i32, %c0_i32_0 : i32, i32
  }
  func.func @transform_6(%arg0: i32) -> (i32, i32) {
    %c0_i32 = arith.constant 0 : i32
    %c0_i32_0 = arith.constant 0 : i32
    %c0_i32_1 = arith.constant 0 : i32
    return %c0_i32, %c0_i32_0 : i32, i32
  }
  func.func @transform_7(%arg0: i32) -> (i32, i32) {
    %c0_i32 = arith.constant 0 : i32
    %c0_i32_0 = arith.constant 0 : i32
    return %c0_i32, %arg0 : i32, i32
  }
}

</mosaic_0001>

<llo_original>
// kernel: value_network_forward.1
$region0: #{value_network_forward.1}
  #allocation0 [shape = 'u32[]', space=smem, size = 0x4, offset = 0x4, fixed_abs, tag = 'smem constant byte address 0x4 - core index']
  #allocation1 [shape = 'u32[144,128]{1,0:T(1,128)}', space=vmem, size = 0x12000, scoped, tag = 'internal scratch']
  #allocation2 [shape = 'f32[1,1]{1,0:T(1,128)S(1)}', space=vmem, size = 0x200, scoped, tag = 'scoped memory for value_network_forward.1']
  %s0 = inlined_call_operand.hbm [shape: f32[8,16], index: 0, kind: input, shape index: {}]
  %s1 = inlined_call_operand.hbm [shape: f32[16,32], index: 1, kind: input, shape index: {}]
  %s2 = inlined_call_operand.vmem [shape: f32[1,32], index: 2, kind: input, shape index: {}]
  %s3 = inlined_call_operand.hbm [shape: f32[32,32], index: 3, kind: input, shape index: {}]
  %s4 = inlined_call_operand.vmem [shape: f32[1,32], index: 4, kind: input, shape index: {}]
  %s5 = inlined_call_operand.vmem [shape: f32[1,32], index: 5, kind: input, shape index: {}]
  %s6 = inlined_call_operand.<no memory space> [shape: f32[1,1], index: 6, kind: input, shape index: {}]
  %s7 = inlined_call_operand.hbm [shape: f32[1,8], index: 7, kind: output, shape index: {}]
  %s8 = sld [smem:[#allocation0]]
  $region50: #{value_network_forward.1} parent=0
    _
  %s10 = ssub.s32 1, %s8
  %s11 = scalar_select 0, %s10, %s8
  %v12 = vstv %s6
  %13 = vst [vmem:[#allocation2] sm:$0x1] %v12
  $region1: #{value_network_forward.1} parent=0
    #allocation3 [shape = 'u8[4096]{0}', space=vmem, size = 0x1000, scoped, tag = 'input window, operand 0, single buffered']
    #allocation4 [shape = 's32[1]{0}', space=sflag, size = 0x4, scoped, tag = 'scoped memory for value_network_forward.1']
    #allocation5 [shape = 's32[1]{0}', space=sflag, size = 0x4, scoped, tag = 'scoped memory for value_network_forward.1']
    #allocation6 [shape = 'u8[8192]{0}', space=vmem, size = 0x2000, scoped, tag = 'input window, operand 1, single buffered']
    #allocation7 [shape = 's32[1]{0}', space=sflag, size = 0x4, scoped, tag = 'scoped memory for value_network_forward.1']
    #allocation8 [shape = 'u8[16384]{0}', space=vmem, size = 0x4000, scoped, tag = 'input window, operand 3, single buffered']
    #allocation9 [shape = 'u8[512]{0}', space=vmem, size = 0x400, scoped, tag = 'output window, operand 0, single buffered']
    %14 = vsyncpa [#allocation4], 0
    %15 = vsyncpa [#allocation7], 0
    %16 = vsyncpa [#allocation5], 0
    // Predicated region
    $region2: #{value_network_forward.1} parent=1 // pred_check
      _
    $region3: #{value_network_forward.1} parent=1 // pred_check_branch
      %18 = sbr.rel (0) target = $region5
    $region4: #{value_network_forward.1} parent=1 // pred_region
      %s20 = ssub.s32 128, 128
      %21 = vsyncadd [#allocation4], %s20
      %s23 = sshll.u32 [#allocation3], 4
      %s24 = int_to_ptr.vmem [resolvable:$true] %s23
      %26 = dma.hbm_to_vmem [thread:$0]  %s0, 128, %s24, [#allocation4]
    $region5: #{value_network_forward.1} parent=1 // pred_fallthru
      _
    // Predicated region
    $region6: #{value_network_forward.1} parent=1 // pred_check
      _
    $region7: #{value_network_forward.1} parent=1 // pred_check_branch
      %28 = sbr.rel (0) target = $region9
    $region8: #{value_network_forward.1} parent=1 // pred_region
      %s30 = ssub.s32 256, 256
      %31 = vsyncadd [#allocation7], %s30
      %s32 = sshll.u32 [#allocation6], 4
      %s33 = int_to_ptr.vmem [resolvable:$true] %s32
      %38 = dma.hbm_to_vmem [thread:$0]  %s1, 256, %s33, [#allocation7], 128, 128, 8
    $region9: #{value_network_forward.1} parent=1 // pred_fallthru
      _
    // Predicated region
    $region10: #{value_network_forward.1} parent=1 // pred_check
      _
    $region11: #{value_network_forward.1} parent=1 // pred_check_branch
      %40 = sbr.rel (0) target = $region13
    $region12: #{value_network_forward.1} parent=1 // pred_region
      _
    $region13: #{value_network_forward.1} parent=1 // pred_fallthru
      _
    // Predicated region
    $region14: #{value_network_forward.1} parent=1 // pred_check
      _
    $region15: #{value_network_forward.1} parent=1 // pred_check_branch
      %42 = sbr.rel (0) target = $region17
    $region16: #{value_network_forward.1} parent=1 // pred_region
      %s44 = ssub.s32 512, 512
      %45 = vsyncadd [#allocation7], %s44
      %s46 = sshll.u32 [#allocation8], 4
      %s47 = int_to_ptr.vmem [resolvable:$true] %s46
      %52 = dma.hbm_to_vmem [thread:$0]  %s3, 512, %s47, [#allocation7], 128, 128, 8
    $region17: #{value_network_forward.1} parent=1 // pred_fallthru
      _
    // Predicated region
    $region18: #{value_network_forward.1} parent=1 // pred_check
      _
    $region19: #{value_network_forward.1} parent=1 // pred_check_branch
      %54 = sbr.rel (0) target = $region21
    $region20: #{value_network_forward.1} parent=1 // pred_region
      _
    $region21: #{value_network_forward.1} parent=1 // pred_fallthru
      _
    // Predicated region
    $region22: #{value_network_forward.1} parent=1 // pred_check
      _
    $region23: #{value_network_forward.1} parent=1 // pred_check_branch
      %56 = sbr.rel (0) target = $region25
    $region24: #{value_network_forward.1} parent=1 // pred_region
      _
    $region25: #{value_network_forward.1} parent=1 // pred_fallthru
      _
    // Predicated region
    $region26: #{value_network_forward.1} parent=1 // pred_check
      _
    $region27: #{value_network_forward.1} parent=1 // pred_check_branch
      %58 = sbr.rel (0) target = $region29
    $region28: #{value_network_forward.1} parent=1 // pred_region
      _
    $region29: #{value_network_forward.1} parent=1 // pred_fallthru
      _
    // Predicated region
    $region30: #{value_network_forward.1} parent=1 // pred_check
      _
    $region31: #{value_network_forward.1} parent=1 // pred_check_branch
      %60 = sbr.rel (0) target = $region33
    $region32: #{value_network_forward.1} parent=1 // pred_region
      %61 = dma.done [#allocation4], 128
    $region33: #{value_network_forward.1} parent=1 // pred_fallthru
      _
    // Predicated region
    $region34: #{value_network_forward.1} parent=1 // pred_check
      _
    $region35: #{value_network_forward.1} parent=1 // pred_check_branch
      %63 = sbr.rel (0) target = $region37
    $region36: #{value_network_forward.1} parent=1 // pred_region
      %64 = dma.done [#allocation7], 256
    $region37: #{value_network_forward.1} parent=1 // pred_fallthru
      _
    // Predicated region
    $region38: #{value_network_forward.1} parent=1 // pred_check
      _
    $region39: #{value_network_forward.1} parent=1 // pred_check_branch
      %66 = sbr.rel (0) target = $region41
    $region40: #{value_network_forward.1} parent=1 // pred_region
      %67 = dma.done [#allocation7], 512
    $region41: #{value_network_forward.1} parent=1 // pred_fallthru
      _
    %v68 = vld [vmem:[#allocation3] sm:$0xff]
    %v69 = vld [vmem:[#allocation6] sm:$0xff]
    %v70 = vld [vmem:[#allocation6 + $0x8] sm:$0xff]
    %v71 = vld [vmem:[%s2] sm:$0x1]
    %v73 = vlaneseq
    %v74 = vshrl.u32 %v73, 7
    %v75 = vsub.s32 0, %v74
    %v76 = vrot.slane %v71, %v75
    %vm78 = vcmask 130048
    %v80 = vsel %vm78, %v68, 0
    %82 = vmatprep.subr.mxu0 0.0
    %83 = vmatpush1.msra.mxu0 0.0
    %84 = vmatprep.subr.mxu0 0.0
    %85 = vmatpush1.msra.mxu0 0.0
    %86 = vmatprep.subr.mxu0 0.0
    %87 = vmatpush1.msra.mxu0 0.0
    %88 = vmatprep.subr.mxu0 0.0
    %89 = vmatpush1.msra.mxu0 0.0
    %90 = vmatprep.subr.mxu0 0.0
    %91 = vmatpush1.msra.mxu0 0.0
    %92 = vmatprep.subr.mxu0 0.0
    %93 = vmatpush1.msra.mxu0 0.0
    %94 = vmatprep.subr.mxu0 0.0
    %95 = vmatpush1.msra.mxu0 0.0
    %96 = vmatprep.subr.mxu0 0.0
    %97 = vmatpush1.msra.mxu0 0.0
    %98 = vmatprep.subr.mxu0 0.0
    %99 = vmatpush1.msra.mxu0 0.0
    %100 = vmatprep.subr.mxu0 0.0
    %101 = vmatpush1.msra.mxu0 0.0
    %102 = vmatprep.subr.mxu0 0.0
    %103 = vmatpush1.msra.mxu0 0.0
    %104 = vmatprep.subr.mxu0 0.0
    %105 = vmatpush1.msra.mxu0 0.0
    %106 = vmatprep.subr.mxu0 0.0
    %107 = vmatpush1.msra.mxu0 0.0
    %108 = vmatprep.subr.mxu0 0.0
    %109 = vmatpush1.msra.mxu0 0.0
    %110 = vmatprep.subr.mxu0 0.0
    %111 = vmatpush1.msra.mxu0 %v70
    %112 = vmatprep.subr.mxu0 0.0
    %113 = vmatpush1.msra.mxu0 %v69
    %114 = vmatprep.subr.mxu0 0.0
    %115 = vmatpush2.msra.mxu0 0.0
    %116 = vmatprep.subr.mxu0 0.0
    %117 = vmatpush2.msra.mxu0 0.0
    %118 = vmatprep.subr.mxu0 0.0
    %119 = vmatpush2.msra.mxu0 0.0
    %120 = vmatprep.subr.mxu0 0.0
    %121 = vmatpush2.msra.mxu0 0.0
    %122 = vmatprep.subr.mxu0 0.0
    %123 = vmatpush2.msra.mxu0 0.0
    %124 = vmatprep.subr.mxu0 0.0
    %125 = vmatpush2.msra.mxu0 0.0
    %126 = vmatprep.subr.mxu0 0.0
    %127 = vmatpush2.msra.mxu0 0.0
    %128 = vmatprep.subr.mxu0 0.0
    %129 = vmatpush2.msra.mxu0 0.0
    %130 = vmatprep.subr.mxu0 0.0
    %131 = vmatpush2.msra.mxu0 0.0
    %132 = vmatprep.subr.mxu0 0.0
    %133 = vmatpush2.msra.mxu0 0.0
    %134 = vmatprep.subr.mxu0 0.0
    %135 = vmatpush2.msra.mxu0 0.0
    %136 = vmatprep.subr.mxu0 0.0
    %137 = vmatpush2.msra.mxu0 0.0
    %138 = vmatprep.subr.mxu0 0.0
    %139 = vmatpush2.msra.mxu0 0.0
    %140 = vmatprep.subr.mxu0 0.0
    %141 = vmatpush2.msra.mxu0 0.0
    %142 = vmatprep.subr.mxu0 0.0
    %143 = vmatpush2.msra.mxu0 0.0
    %144 = vmatprep.subr.mxu0 0.0
    %145 = vmatpush2.msra.mxu0 0.0
    %146 = vmatprep.mubr.f32.mxu0 0.0
    %147 = vmatmul.mubr.f32.gmra.mxu0 %v80
    %v148 = vpop.f32.mrf.mxu0
    %v149 = vadd.f32 %v76, %v148
    %v150 = vpop.f32.mrf.mxu0
    %151 = vdwg.mxu0
    %v152 = vmax.f32 %v149, 0.0
    %v153 = vld [vmem:[#allocation8] sm:$0xff]
    %v154 = vld [vmem:[#allocation8 + $0x8] sm:$0xff]
    %v155 = vld [vmem:[#allocation8 + $0x10] sm:$0xff]
    %v156 = vld [vmem:[#allocation8 + $0x18] sm:$0xff]
    %v157 = vld [vmem:[%s4] sm:$0x1]
    %v159 = vlaneseq
    %v160 = vshrl.u32 %v159, 7
    %v161 = vsub.s32 0, %v160
    %v162 = vrot.slane %v157, %v161
    %vm164 = vcmask 261120
    %v166 = vsel %vm164, %v152, 0
    %168 = vmatprep.subr.mxu0 0.0
    %169 = vmatpush1.msra.mxu0 0.0
    %170 = vmatprep.subr.mxu0 0.0
    %171 = vmatpush1.msra.mxu0 0.0
    %172 = vmatprep.subr.mxu0 0.0
    %173 = vmatpush1.msra.mxu0 0.0
    %174 = vmatprep.subr.mxu0 0.0
    %175 = vmatpush1.msra.mxu0 0.0
    %176 = vmatprep.subr.mxu0 0.0
    %177 = vmatpush1.msra.mxu0 0.0
    %178 = vmatprep.subr.mxu0 0.0
    %179 = vmatpush1.msra.mxu0 0.0
    %180 = vmatprep.subr.mxu0 0.0
    %181 = vmatpush1.msra.mxu0 0.0
    %182 = vmatprep.subr.mxu0 0.0
    %183 = vmatpush1.msra.mxu0 0.0
    %184 = vmatprep.subr.mxu0 0.0
    %185 = vmatpush1.msra.mxu0 0.0
    %186 = vmatprep.subr.mxu0 0.0
    %187 = vmatpush1.msra.mxu0 0.0
    %188 = vmatprep.subr.mxu0 0.0
    %189 = vmatpush1.msra.mxu0 0.0
    %190 = vmatprep.subr.mxu0 0.0
    %191 = vmatpush1.msra.mxu0 0.0
    %192 = vmatprep.subr.mxu0 0.0
    %193 = vmatpush1.msra.mxu0 %v156
    %194 = vmatprep.subr.mxu0 0.0
    %195 = vmatpush1.msra.mxu0 %v155
    %196 = vmatprep.subr.mxu0 0.0
    %197 = vmatpush1.msra.mxu0 %v154
    %198 = vmatprep.subr.mxu0 0.0
    %199 = vmatpush1.msra.mxu0 %v153
    %200 = vmatprep.subr.mxu0 0.0
    %201 = vmatpush2.msra.mxu0 0.0
    %202 = vmatprep.subr.mxu0 0.0
    %203 = vmatpush2.msra.mxu0 0.0
    %204 = vmatprep.subr.mxu0 0.0
    %205 = vmatpush2.msra.mxu0 0.0
    %206 = vmatprep.subr.mxu0 0.0
    %207 = vmatpush2.msra.mxu0 0.0
    %208 = vmatprep.subr.mxu0 0.0
    %209 = vmatpush2.msra.mxu0 0.0
    %210 = vmatprep.subr.mxu0 0.0
    %211 = vmatpush2.msra.mxu0 0.0
    %212 = vmatprep.subr.mxu0 0.0
    %213 = vmatpush2.msra.mxu0 0.0
    %214 = vmatprep.subr.mxu0 0.0
    %215 = vmatpush2.msra.mxu0 0.0
    %216 = vmatprep.subr.mxu0 0.0
    %217 = vmatpush2.msra.mxu0 0.0
    %218 = vmatprep.subr.mxu0 0.0
    %219 = vmatpush2.msra.mxu0 0.0
    %220 = vmatprep.subr.mxu0 0.0
    %221 = vmatpush2.msra.mxu0 0.0
    %222 = vmatprep.subr.mxu0 0.0
    %223 = vmatpush2.msra.mxu0 0.0
    %224 = vmatprep.subr.mxu0 0.0
    %225 = vmatpush2.msra.mxu0 0.0
    %226 = vmatprep.subr.mxu0 0.0
    %227 = vmatpush2.msra.mxu0 0.0
    %228 = vmatprep.subr.mxu0 0.0
    %229 = vmatpush2.msra.mxu0 0.0
    %230 = vmatprep.subr.mxu0 0.0
    %231 = vmatpush2.msra.mxu0 0.0
    %232 = vmatprep.mubr.f32.mxu0 0.0
    %233 = vmatmul.mubr.f32.gmra.mxu0 %v166
    %v234 = vpop.f32.mrf.mxu0
    %v235 = vadd.f32 %v162, %v234
    %v236 = vpop.f32.mrf.mxu0
    %237 = vdwg.mxu0
    %v238 = vmax.f32 %v235, 0.0
    %v239 = vld [vmem:[%s5] sm:$0x1]
    %v241 = vlaneseq
    %v242 = vshrl.u32 %v241, 7
    %v243 = vsub.s32 0, %v242
    %v244 = vrot.slane %v239, %v243
    %v246 = vmul.f32 %v238, %v244
    %v247 = vsel %vm164, %v246, 0.0
    %248 = vadd.xlane.f32.xlu0 %v247
    %v249 = vpop.xlane.xlu0 %248
    %v250 = vld [vmem:[#allocation2] sm:$0x1]
    %252 = vset.pattern.permute.xlu0 0
    %253 = vperm.xlu0 %252, %v250
    %v254 = vpop.permute.xlu0 %253
    %v256 = vlaneseq
    %v257 = vshrl.u32 %v256, 7
    %v258 = vsub.s32 0, %v257
    %v259 = vrot.slane %v254, %v258
    %v260 = vadd.f32 %v249, %v259
    %v262 = vlaneseq
    %v263 = vand.u32 %v262, 127
    %v264 = vlaneseq
    %v265 = vshrl.u32 %v264, 7
    %v266 = vsub.s32 %v263, %v265
    %v267 = vrot.slane %v260, %v266
    %vm269 = vcmask 57344
    %270 = vst.msk [vmem:[#allocation9] sm:$0x1] %vm269, %v267
    // Predicated region
    $region42: #{value_network_forward.1} parent=1 // pred_check
      _
    $region43: #{value_network_forward.1} parent=1 // pred_check_branch
      %272 = sbr.rel (0) target = $region45
    $region44: #{value_network_forward.1} parent=1 // pred_region
      %s274 = ssub.s32 16, 16
      %275 = vsyncadd [#allocation5], %s274
      %s277 = sshll.u32 [#allocation9], 4
      %s278 = int_to_ptr.vmem [resolvable:$true] %s277
      %280 = dma.vmem_to_hbm [thread:$0]  %s278, 16, %s7, [#allocation5]
    $region45: #{value_network_forward.1} parent=1 // pred_fallthru
      _
    // Predicated region
    $region46: #{value_network_forward.1} parent=1 // pred_check
      _
    $region47: #{value_network_forward.1} parent=1 // pred_check_branch
      %282 = sbr.rel (0) target = $region49
    $region48: #{value_network_forward.1} parent=1 // pred_region
      %283 = dma.done [#allocation5], 16
    $region49: #{value_network_forward.1} parent=1 // pred_fallthru
      _
    %284 = vsyncpa [#allocation4], 1
    %285 = vsyncpa [#allocation7], 1
    %286 = vsyncpa [#allocation5], 1

</llo_original>
